<compile_context>
chip_gen: v7x
topology: tpu7x:2x2x1
jax: 0.10.0
libtpu: 0.0.40
codegen_flags: <defaults>
</compile_context>

<pallas_src>
import math

import jax
import jax.numpy as jnp
from jax import lax
from jax.experimental import pallas as pl
from jax.experimental.pallas import tpu as pltpu


# --------------------------------------------------------------------------- kernel
def _sfb2d_kernel(ll_ref, yh_ref, r0_ref, r1_ref, c0_ref, c1_ref, o_ref):
    # ll_ref : (1, 1, h, w)        lowpass band for this (n, c)
    # yh_ref : (1, 1, 3, h, w)     stacked (LH, HL, HH) bands
    # r0_ref : (w, Wout)           row (width) synthesis matrix for g0_row
    # r1_ref : (w, Wout)           row (width) synthesis matrix for g1_row
    # c0_ref : (Hout, h)           column (height) synthesis matrix for g0_col
    # c1_ref : (Hout, h)           column (height) synthesis matrix for g1_col
    # o_ref  : (1, 1, Hout, Wout)
    ll = ll_ref[0, 0]
    lh = yh_ref[0, 0, 0]
    hl = yh_ref[0, 0, 1]
    hh = yh_ref[0, 0, 2]

    r0 = r0_ref[...]
    r1 = r1_ref[...]

    # width-direction synthesis (upsample + filter) as MXU matmuls
    u = (jnp.dot(ll, r0, preferred_element_type=jnp.float32)
         + jnp.dot(hl, r1, preferred_element_type=jnp.float32))      # (h, Wout)
    v = (jnp.dot(lh, r0, preferred_element_type=jnp.float32)
         + jnp.dot(hh, r1, preferred_element_type=jnp.float32))      # (h, Wout)

    # height-direction synthesis
    y = (jnp.dot(c0_ref[...], u, preferred_element_type=jnp.float32)
         + jnp.dot(c1_ref[...], v, preferred_element_type=jnp.float32))  # (Hout, Wout)

    o_ref[0, 0] = y.astype(o_ref.dtype)


# --------------------------------------------------------------------------- glue
def _synthesis_matrix(g, n_in):
    """Matrix S (n_out, n_in) with S[j, i] = g[j - 2*i + L - 2] (0 outside [0, L)).

    S @ x realises torch.conv_transpose1d(x, g, stride=2, padding=L-2), i.e. the
    1D synthesis filter bank step of pytorch_wavelets' sfb1d with mode='zero'.
    """
    g = jnp.asarray(g, jnp.float32)
    L = g.shape[0]
    n_out = 2 * n_in - L + 2
    j = jnp.arange(n_out)[:, None]
    i = jnp.arange(n_in)[None, :]
    k = j - 2 * i + (L - 2)
    valid = (k >= 0) & (k < L)
    return jnp.where(valid, g[jnp.clip(k, 0, L - 1)], 0.0)


def _sfb2d_level(ll, highs, g0_col, g1_col, g0_row, g1_row):
    """One inverse-DWT level: (ll, highs) -> reconstructed lowpass of next level."""
    N, C, h, w = ll.shape
    L = int(jnp.asarray(g0_col).shape[0])
    Hout = 2 * h - L + 2
    Wout = 2 * w - L + 2

    # tiny constant "weights"; built once in the wrapper (folded filters)
    c0 = _synthesis_matrix(g0_col, h)          # (Hout, h)
    c1 = _synthesis_matrix(g1_col, h)          # (Hout, h)
    r0 = _synthesis_matrix(g0_row, w).T        # (w, Wout)
    r1 = _synthesis_matrix(g1_row, w).T        # (w, Wout)

    flops = N * C * (4 * 2 * h * w * Wout + 2 * 2 * Hout * h * Wout)
    bytes_accessed = 4 * (N * C * (4 * h * w + Hout * Wout)
                          + 2 * w * Wout + 2 * Hout * h)

    return pl.pallas_call(
        _sfb2d_kernel,
        out_shape=jax.ShapeDtypeStruct((N, C, Hout, Wout), ll.dtype),
        grid_spec=pltpu.PrefetchScalarGridSpec(
            num_scalar_prefetch=0,
            grid=(N, C),
            in_specs=[
                pl.BlockSpec((1, 1, h, w), lambda n, c: (n, c, 0, 0)),
                pl.BlockSpec((1, 1, 3, h, w), lambda n, c: (n, c, 0, 0, 0)),
                pl.BlockSpec((w, Wout), lambda n, c: (0, 0)),
                pl.BlockSpec((w, Wout), lambda n, c: (0, 0)),
                pl.BlockSpec((Hout, h), lambda n, c: (0, 0)),
                pl.BlockSpec((Hout, h), lambda n, c: (0, 0)),
            ],
            out_specs=pl.BlockSpec((1, 1, Hout, Wout), lambda n, c: (n, c, 0, 0)),
        ),
        compiler_params=pltpu.CompilerParams(
            dimension_semantics=("parallel", "parallel")),
        cost_estimate=pl.CostEstimate(
            flops=flops, transcendentals=0, bytes_accessed=bytes_accessed),
    )(ll, highs, r0, r1, c0, c1)


def dwt_inverse(yl, yh, g0_col, g1_col, g0_row, g1_row):
    """DWTInverse.forward((yl, yh)) with mode='zero'.

    yl : (N, C, H', W') lowpass;  yh : list of (N, C, 3, H'', W'') bandpass
    (finest level first, as returned by DWTForward).  Returns (N, C, H, W).
    """
    # TODO(synk): only mode='zero' is implemented (periodization/symmetric modes
    # of pytorch_wavelets are not translated).
    ll = yl
    for high in yh[::-1]:
        if high is None:
            high = jnp.zeros(
                (ll.shape[0], ll.shape[1], 3, ll.shape[-2], ll.shape[-1]),
                ll.dtype)
        if ll.shape[-2] > high.shape[-2]:
            ll = ll[..., :-1, :]
        if ll.shape[-1] > high.shape[-1]:
            ll = ll[..., :-1]
        ll = _sfb2d_level(ll, high, g0_col, g1_col, g0_row, g1_row)
    return ll


# --------------------------------------------------------------------------- reference
def _ref_sfb2d(ll, highs, g0_col, g1_col, g0_row, g1_row):
    """Pure-XLA reference for one SFB2D level (grouped transposed convs)."""
    N, C = ll.shape[0], ll.shape[1]
    lh, hl, hh = highs[:, :, 0], highs[:, :, 1], highs[:, :, 2]

    def t2d(x, g_h, g_w):
        L = g_h.shape[0]
        k = jnp.flip(g_h)[:, None] * jnp.flip(g_w)[None, :]      # flipped 2D taps
        k = jnp.broadcast_to(k[None, None], (C, 1, L, L))
        # conv_transpose2d(stride=2, padding=L-2) == lhs-dilated correlation, pad (1,1)
        return lax.conv_general_dilated(
            x, k, window_strides=(1, 1), padding=[(1, 1), (1, 1)],
            lhs_dilation=(2, 2),
            dimension_numbers=("NCHW", "OIHW", "NCHW"),
            feature_group_count=C)

    return (t2d(ll, g0_col, g0_row) + t2d(lh, g1_col, g0_row)
            + t2d(hl, g0_col, g1_row) + t2d(hh, g1_col, g1_row))


def dwt_inverse_reference(yl, yh, g0_col, g1_col, g0_row, g1_row):
    ll = yl
    for high in yh[::-1]:
        if high is None:
            high = jnp.zeros(
                (ll.shape[0], ll.shape[1], 3, ll.shape[-2], ll.shape[-1]),
                ll.dtype)
        if ll.shape[-2] > high.shape[-2]:
            ll = ll[..., :-1, :]
        if ll.shape[-1] > high.shape[-1]:
            ll = ll[..., :-1]
        ll = _ref_sfb2d(ll, high, g0_col, g1_col, g0_row, g1_row)
    return ll


# --------------------------------------------------------------------------- main
if __name__ == "__main__":
    # db1 (Haar) reconstruction filters, as produced by pywt/prep_filt_sfb2d
    s = 1.0 / math.sqrt(2.0)
    g0 = jnp.array([s, s], jnp.float32)    # rec_lo
    g1 = jnp.array([s, -s], jnp.float32)   # rec_hi

    N, C = 2, 3
    key = jax.random.PRNGKey(0)
    k_yl, k_h0, k_h1 = jax.random.split(key, 3)
    yl = jax.random.normal(k_yl, (N, C, 8, 8), jnp.float32)
    yh = [
        jax.random.normal(k_h0, (N, C, 3, 16, 16), jnp.float32),  # finest level
        jax.random.normal(k_h1, (N, C, 3, 8, 8), jnp.float32),    # coarsest level
    ]

    out = dwt_inverse(yl, yh, g0, g1, g0, g1)
    out = jax.block_until_ready(out)

    ref = jax.block_until_ready(dwt_inverse_reference(yl, yh, g0, g1, g0, g1))
    assert out.shape == (N, C, 32, 32), out.shape
    assert jnp.allclose(out, ref, atol=1e-4, rtol=1e-4), float(
        jnp.max(jnp.abs(out - ref)))

    print("KERNEL_OK")
</pallas_src>

<mosaic_0001>
module attributes {stable_mosaic.version = 11 : i64} {
  func.func @_sfb2d_kernel(%arg0: i32, %arg1: i32, %arg2: memref<1x1x8x8xf32, #tpu.memory_space<vmem>>, %arg3: memref<1x1x3x8x8xf32, #tpu.memory_space<vmem>>, %arg4: memref<8x16xf32, #tpu.memory_space<vmem>>, %arg5: memref<8x16xf32, #tpu.memory_space<vmem>>, %arg6: memref<16x8xf32, #tpu.memory_space<vmem>>, %arg7: memref<16x8xf32, #tpu.memory_space<vmem>>, %arg8: memref<1x1x16x16xf32, #tpu.memory_space<vmem>>) attributes {dimension_semantics = [#tpu.dimension_semantics<parallel>, #tpu.dimension_semantics<parallel>], iteration_bounds = array<i64: 2, 3>, scalar_prefetch = 0 : i64, scratch_operands = 0 : i64, tpu.core_type = #tpu.core_type<tc>, window_params = [{transform_indices = @transform_0, window_bounds = array<i64: 1, 1, 8, 8>}, {transform_indices = @transform_1, window_bounds = array<i64: 1, 1, 3, 8, 8>}, {pipeline_mode = #tpu.pipeline_mode<synchronous>, transform_indices = @transform_2, window_bounds = array<i64: 8, 16>}, {pipeline_mode = #tpu.pipeline_mode<synchronous>, transform_indices = @transform_3, window_bounds = array<i64: 8, 16>}, {pipeline_mode = #tpu.pipeline_mode<synchronous>, transform_indices = @transform_4, window_bounds = array<i64: 16, 8>}, {pipeline_mode = #tpu.pipeline_mode<synchronous>, transform_indices = @transform_5, window_bounds = array<i64: 16, 8>}, {transform_indices = @transform_6, window_bounds = array<i64: 1, 1, 16, 16>}]} {
    %c0 = arith.constant 0 : index
    %c0_0 = arith.constant 0 : index
    %c0_1 = arith.constant 0 : index
    %c0_2 = arith.constant 0 : index
    %0 = vector.load %arg2[%c0, %c0_0, %c0_1, %c0_2] : memref<1x1x8x8xf32, #tpu.memory_space<vmem>>, vector<1x1x8x8xf32>
    %1 = vector.shape_cast %0 : vector<1x1x8x8xf32> to vector<8x8xf32>
    %c0_3 = arith.constant 0 : index
    %c0_4 = arith.constant 0 : index
    %c0_5 = arith.constant 0 : index
    %c0_6 = arith.constant 0 : index
    %c0_7 = arith.constant 0 : index
    %2 = vector.load %arg3[%c0_3, %c0_4, %c0_5, %c0_6, %c0_7] : memref<1x1x3x8x8xf32, #tpu.memory_space<vmem>>, vector<1x1x1x8x8xf32>
    %3 = vector.shape_cast %2 : vector<1x1x1x8x8xf32> to vector<8x8xf32>
    %c0_8 = arith.constant 0 : index
    %c0_9 = arith.constant 0 : index
    %c1 = arith.constant 1 : index
    %c0_10 = arith.constant 0 : index
    %c0_11 = arith.constant 0 : index
    %4 = vector.load %arg3[%c0_8, %c0_9, %c1, %c0_10, %c0_11] : memref<1x1x3x8x8xf32, #tpu.memory_space<vmem>>, vector<1x1x1x8x8xf32>
    %5 = vector.shape_cast %4 : vector<1x1x1x8x8xf32> to vector<8x8xf32>
    %c0_12 = arith.constant 0 : index
    %c0_13 = arith.constant 0 : index
    %c2 = arith.constant 2 : index
    %c0_14 = arith.constant 0 : index
    %c0_15 = arith.constant 0 : index
    %6 = vector.load %arg3[%c0_12, %c0_13, %c2, %c0_14, %c0_15] : memref<1x1x3x8x8xf32, #tpu.memory_space<vmem>>, vector<1x1x1x8x8xf32>
    %7 = vector.shape_cast %6 : vector<1x1x1x8x8xf32> to vector<8x8xf32>
    %c0_16 = arith.constant 0 : index
    %c0_17 = arith.constant 0 : index
    %8 = vector.load %arg4[%c0_16, %c0_17] : memref<8x16xf32, #tpu.memory_space<vmem>>, vector<8x16xf32>
    %c0_18 = arith.constant 0 : index
    %c0_19 = arith.constant 0 : index
    %9 = vector.load %arg5[%c0_18, %c0_19] : memref<8x16xf32, #tpu.memory_space<vmem>>, vector<8x16xf32>
    %cst = arith.constant dense<0.000000e+00> : vector<8x16xf32>
    %10 = tpu.matmul %1, %8, %cst {dimension_numbers = #tpu.dot_dimension_numbers<[1], [0], [0], [1], [0, 0, 1, 1], [], []>} : vector<8x8xf32>, vector<8x16xf32>, vector<8x16xf32> -> vector<8x16xf32>
    %cst_20 = arith.constant dense<0.000000e+00> : vector<8x16xf32>
    %11 = tpu.matmul %5, %9, %cst_20 {dimension_numbers = #tpu.dot_dimension_numbers<[1], [0], [0], [1], [0, 0, 1, 1], [], []>} : vector<8x8xf32>, vector<8x16xf32>, vector<8x16xf32> -> vector<8x16xf32>
    %12 = arith.addf %10, %11 : vector<8x16xf32>
    %cst_21 = arith.constant dense<0.000000e+00> : vector<8x16xf32>
    %13 = tpu.matmul %3, %8, %cst_21 {dimension_numbers = #tpu.dot_dimension_numbers<[1], [0], [0], [1], [0, 0, 1, 1], [], []>} : vector<8x8xf32>, vector<8x16xf32>, vector<8x16xf32> -> vector<8x16xf32>
    %cst_22 = arith.constant dense<0.000000e+00> : vector<8x16xf32>
    %14 = tpu.matmul %7, %9, %cst_22 {dimension_numbers = #tpu.dot_dimension_numbers<[1], [0], [0], [1], [0, 0, 1, 1], [], []>} : vector<8x8xf32>, vector<8x16xf32>, vector<8x16xf32> -> vector<8x16xf32>
    %15 = arith.addf %13, %14 : vector<8x16xf32>
    %c0_23 = arith.constant 0 : index
    %c0_24 = arith.constant 0 : index
    %16 = vector.load %arg6[%c0_23, %c0_24] : memref<16x8xf32, #tpu.memory_space<vmem>>, vector<16x8xf32>
    %cst_25 = arith.constant dense<0.000000e+00> : vector<16x16xf32>
    %17 = tpu.matmul %16, %12, %cst_25 {dimension_numbers = #tpu.dot_dimension_numbers<[1], [0], [0], [1], [0, 0, 1, 1], [], []>} : vector<16x8xf32>, vector<8x16xf32>, vector<16x16xf32> -> vector<16x16xf32>
    %c0_26 = arith.constant 0 : index
    %c0_27 = arith.constant 0 : index
    %18 = vector.load %arg7[%c0_26, %c0_27] : memref<16x8xf32, #tpu.memory_space<vmem>>, vector<16x8xf32>
    %cst_28 = arith.constant dense<0.000000e+00> : vector<16x16xf32>
    %19 = tpu.matmul %18, %15, %cst_28 {dimension_numbers = #tpu.dot_dimension_numbers<[1], [0], [0], [1], [0, 0, 1, 1], [], []>} : vector<16x8xf32>, vector<8x16xf32>, vector<16x16xf32> -> vector<16x16xf32>
    %20 = arith.addf %17, %19 : vector<16x16xf32>
    %c0_29 = arith.constant 0 : index
    %c0_30 = arith.constant 0 : index
    %c0_31 = arith.constant 0 : index
    %c0_32 = arith.constant 0 : index
    %21 = vector.load %arg8[%c0_29, %c0_30, %c0_31, %c0_32] : memref<1x1x16x16xf32, #tpu.memory_space<vmem>>, vector<1x1x16x16xf32>
    %22 = vector.shape_cast %21 : vector<1x1x16x16xf32> to vector<16x16xf32>
    %23 = vector.shape_cast %20 : vector<16x16xf32> to vector<1x1x16x16xf32>
    tpu.vector_store %arg8[%c0_29, %c0_30, %c0_31, %c0_32], %23 {strides = array<i32>} : memref<1x1x16x16xf32, #tpu.memory_space<vmem>>, vector<1x1x16x16xf32>,
    return
  }
  func.func @transform_0(%arg0: i32, %arg1: i32) -> (i32, i32, i32, i32) {
    %c0_i32 = arith.constant 0 : i32
    %c0_i32_0 = arith.constant 0 : i32
    %c0_i32_1 = arith.constant 0 : i32
    return %arg0, %arg1, %c0_i32, %c0_i32_0 : i32, i32, i32, i32
  }
  func.func @transform_1(%arg0: i32, %arg1: i32) -> (i32, i32, i32, i32, i32) {
    %c0_i32 = arith.constant 0 : i32
    %c0_i32_0 = arith.constant 0 : i32
    %c0_i32_1 = arith.constant 0 : i32
    %c0_i32_2 = arith.constant 0 : i32
    return %arg0, %arg1, %c0_i32, %c0_i32_0, %c0_i32_1 : i32, i32, i32, i32, i32
  }
  func.func @transform_2(%arg0: i32, %arg1: i32) -> (i32, i32) {
    %c0_i32 = arith.constant 0 : i32
    %c0_i32_0 = arith.constant 0 : i32
    %c0_i32_1 = arith.constant 0 : i32
    return %c0_i32, %c0_i32_0 : i32, i32
  }
  func.func @transform_3(%arg0: i32, %arg1: i32) -> (i32, i32) {
    %c0_i32 = arith.constant 0 : i32
    %c0_i32_0 = arith.constant 0 : i32
    %c0_i32_1 = arith.constant 0 : i32
    return %c0_i32, %c0_i32_0 : i32, i32
  }
  func.func @transform_4(%arg0: i32, %arg1: i32) -> (i32, i32) {
    %c0_i32 = arith.constant 0 : i32
    %c0_i32_0 = arith.constant 0 : i32
    %c0_i32_1 = arith.constant 0 : i32
    return %c0_i32, %c0_i32_0 : i32, i32
  }
  func.func @transform_5(%arg0: i32, %arg1: i32) -> (i32, i32) {
    %c0_i32 = arith.constant 0 : i32
    %c0_i32_0 = arith.constant 0 : i32
    %c0_i32_1 = arith.constant 0 : i32
    return %c0_i32, %c0_i32_0 : i32, i32
  }
  func.func @transform_6(%arg0: i32, %arg1: i32) -> (i32, i32, i32, i32) {
    %c0_i32 = arith.constant 0 : i32
    %c0_i32_0 = arith.constant 0 : i32
    %c0_i32_1 = arith.constant 0 : i32
    return %arg0, %arg1, %c0_i32, %c0_i32_0 : i32, i32, i32, i32
  }
}

</mosaic_0001>

<llo_original>
// kernel: tpu_custom_call.1
$region0: #{tpu_custom_call.1}
  #allocation0 [shape = 'u32[]', space=smem, size = 0x4, offset = 0x4, fixed_abs, tag = 'smem constant byte address 0x4 - core index']
  #allocation1 [shape = 'u32[144,128]{1,0:T(1,128)}', space=vmem, size = 0x12000, scoped, tag = 'internal scratch']
  %s0 = inlined_call_operand.vmem [shape: f32[2,3,8,8], index: 0, kind: input, shape index: {}]
  %s1 = inlined_call_operand.hbm [shape: f32[2,3,3,8,8], index: 1, kind: input, shape index: {}]
  %s2 = inlined_call_operand.hbm [shape: f32[8,16], index: 2, kind: input, shape index: {}]
  %s3 = inlined_call_operand.hbm [shape: f32[8,16], index: 3, kind: input, shape index: {}]
  %s4 = inlined_call_operand.vmem [shape: f32[16,8], index: 4, kind: input, shape index: {}]
  %s5 = inlined_call_operand.vmem [shape: f32[16,8], index: 5, kind: input, shape index: {}]
  %s6 = inlined_call_operand.hbm [shape: f32[2,3,16,16], index: 6, kind: output, shape index: {}]
  %s7 = sld [smem:[#allocation0]]
  $region69: #{tpu_custom_call.1} parent=0
    _
  %s9 = ssub.s32 1, %s7
  %s10 = scalar_select 0, %s9, %s7
  $region1: #{tpu_custom_call.1} parent=0
    #allocation2 [shape = 'u8[24576]{0}', space=vmem, size = 0x6000, scoped, tag = 'input window, operand 1']
    #allocation3 [shape = 's32[2]{0}', space=sflag, size = 0x8, scoped, tag = 'scoped memory for tpu_custom_call.1']
    #allocation4 [shape = 's32[2]{0}', space=sflag, size = 0x8, scoped, tag = 'scoped memory for tpu_custom_call.1']
    #allocation5 [shape = 'u8[4096]{0}', space=vmem, size = 0x1000, scoped, tag = 'input window, operand 2, single buffered']
    #allocation6 [shape = 's32[1]{0}', space=sflag, size = 0x4, scoped, tag = 'scoped memory for tpu_custom_call.1']
    #allocation7 [shape = 'u8[4096]{0}', space=vmem, size = 0x1000, scoped, tag = 'input window, operand 3, single buffered']
    #allocation8 [shape = 'u8[16384]{0}', space=vmem, size = 0x4000, scoped, tag = 'output window, operand 0']
    %11 = vsyncpa [#allocation3], 0
    %s12 = scalar_lea.sflag [#allocation3], 1
    %13 = vsyncpa %s12, 0
    %14 = vsyncpa [#allocation6], 0
    %15 = vsyncpa [#allocation4], 0
    %s16 = scalar_lea.sflag [#allocation4], 1
    %17 = vsyncpa %s16, 0
    loop: start=0, step=1, limit=8
    $region2: #{tpu_custom_call.1} parent=1 // loop_pre_header
      _
    $region3: #{tpu_custom_call.1} parent=1 // loop_header
      %s19 = sphi 0, %s23
      %p20 = scmp.ge.s32.totalorder %s19, 8
      %s26 = sphi 0, %s38
      %s27 = sphi 0, %s34
      %s28 = sphi 0, %s26
      %s29 = sphi 0, %s27
      %s30 = sphi 0, %s28
      %s31 = sphi 0, %s29
      %s43 = sphi 0, %s45
      %s46 = sphi 0, %s43
      %s47 = sphi 0, %s46
      %s63 = sphi 0, %s47
      %s71 = sphi 0, %s73
      %s74 = sphi 0, %s71
      %s75 = sphi 0, %s74
      %s91 = sphi 0, %s75
      %s95 = sphi 0, %s95
      %s97 = sphi 0, %s95
      %s98 = sphi 0, %s97
      %s112 = sphi 0, %s98
      %s116 = sphi 0, %s116
      %s118 = sphi 0, %s116
      %s119 = sphi 0, %s118
      %s133 = sphi 0, %s119
      %s137 = sphi 0, %s137
      %s139 = sphi 0, %s137
      %s140 = sphi 0, %s139
      %s154 = sphi 0, %s140
      %s158 = sphi 0, %s158
      %s160 = sphi 0, %s158
      %s161 = sphi 0, %s160
      %s175 = sphi 0, %s161
      %s183 = sphi 0, %s185
      %s186 = sphi 0, %s183
      %s187 = sphi 0, %s186
      %s203 = sphi 0, %s187
    $region4: #{tpu_custom_call.1} parent=1 // loop_header_branch
      %22 = sbr.rel (%p20) target = $region8
    $region5: #{tpu_custom_call.1} parent=1 // loop_body
      %s24 = ssub.s32 %s19, 1
      %s25 = ssub.s32 %s19, 2
      %s32 = sadd.s32 1, %s27
      %p33 = scmp.ge.s32.totalorder %s32, 3
      %s34 = scalar_select %p33, 0, %s32
      %s35 = sadd.s32 1, %s26
      %s36 = scalar_select %p33, %s35, %s26
      %p37 = scmp.ge.s32.totalorder %s36, 2
      %s38 = scalar_select %p37, 0, %s36
      %s39 = ssub.s32 %s26, %s38
      %s40 = ssub.s32 %s27, %s34
      %s41 = sor.u32 %s39, %s40
      %p42 = scmp.eq.s32.totalorder %s41, 0
      %s44 = sadd.s32 %s43, 1
      %s45 = scalar_select %p42, %s43, %s44
      %p48 = pneg %p42
      %p49 = scmp.eq.s32.totalorder %s19, 5
      %p50 = por %p48, %p49
      %p51 = scmp.ne.s32.totalorder %s43, %s46
      %p52 = scmp.eq.s32.totalorder %s19, 0
      %p53 = por %p51, %p52
      %p54 = scmp.ne.s32.totalorder %s43, %s46
      %p55 = scmp.eq.s32.totalorder %s24, 5
      %p56 = por %p54, %p55
      %p57 = scmp.ne.s32.totalorder %s46, %s47
      %p58 = scmp.eq.s32.totalorder %s24, 0
      %p59 = por %p57, %p58
      %p60 = scmp.ne.s32.totalorder %s46, %s47
      %p61 = scmp.eq.s32.totalorder %s25, 5
      %p62 = por %p60, %p61
      %p64 = scmp.ne.s32.totalorder %s47, %s63
      %p65 = scmp.eq.s32.totalorder %s25, 0
      %p66 = por %p64, %p65
      %s67 = ssub.s32 %s26, %s38
      %s68 = ssub.s32 %s27, %s34
      %s69 = sor.u32 %s67, %s68
      %p70 = scmp.eq.s32.totalorder %s69, 0
      %s72 = sadd.s32 %s71, 1
      %s73 = scalar_select %p70, %s71, %s72
      %p76 = pneg %p70
      %p77 = scmp.eq.s32.totalorder %s19, 5
      %p78 = por %p76, %p77
      %p79 = scmp.ne.s32.totalorder %s71, %s74
      %p80 = scmp.eq.s32.totalorder %s19, 0
      %p81 = por %p79, %p80
      %p82 = scmp.ne.s32.totalorder %s71, %s74
      %p83 = scmp.eq.s32.totalorder %s24, 5
      %p84 = por %p82, %p83
      %p85 = scmp.ne.s32.totalorder %s74, %s75
      %p86 = scmp.eq.s32.totalorder %s24, 0
      %p87 = por %p85, %p86
      %p88 = scmp.ne.s32.totalorder %s74, %s75
      %p89 = scmp.eq.s32.totalorder %s25, 5
      %p90 = por %p88, %p89
      %p92 = scmp.ne.s32.totalorder %s75, %s91
      %p93 = scmp.eq.s32.totalorder %s25, 0
      %p94 = por %p92, %p93
      %s96 = sadd.s32 %s95, 1
      %p99 = scmp.eq.s32.totalorder %s19, 5
      %p100 = scmp.ne.s32.totalorder %s95, %s97
      %p101 = scmp.eq.s32.totalorder %s19, 0
      %p102 = por %p100, %p101
      %p103 = scmp.ne.s32.totalorder %s95, %s97
      %p104 = scmp.eq.s32.totalorder %s24, 5
      %p105 = por %p103, %p104
      %p106 = scmp.ne.s32.totalorder %s97, %s98
      %p107 = scmp.eq.s32.totalorder %s24, 0
      %p108 = por %p106, %p107
      %p109 = scmp.ne.s32.totalorder %s97, %s98
      %p110 = scmp.eq.s32.totalorder %s25, 5
      %p111 = por %p109, %p110
      %p113 = scmp.ne.s32.totalorder %s98, %s112
      %p114 = scmp.eq.s32.totalorder %s25, 0
      %p115 = por %p113, %p114
      %s117 = sadd.s32 %s116, 1
      %p120 = scmp.eq.s32.totalorder %s19, 5
      %p121 = scmp.ne.s32.totalorder %s116, %s118
      %p122 = scmp.eq.s32.totalorder %s19, 0
      %p123 = por %p121, %p122
      %p124 = scmp.ne.s32.totalorder %s116, %s118
      %p125 = scmp.eq.s32.totalorder %s24, 5
      %p126 = por %p124, %p125
      %p127 = scmp.ne.s32.totalorder %s118, %s119
      %p128 = scmp.eq.s32.totalorder %s24, 0
      %p129 = por %p127, %p128
      %p130 = scmp.ne.s32.totalorder %s118, %s119
      %p131 = scmp.eq.s32.totalorder %s25, 5
      %p132 = por %p130, %p131
      %p134 = scmp.ne.s32.totalorder %s119, %s133
      %p135 = scmp.eq.s32.totalorder %s25, 0
      %p136 = por %p134, %p135
      %s138 = sadd.s32 %s137, 1
      %p141 = scmp.eq.s32.totalorder %s19, 5
      %p142 = scmp.ne.s32.totalorder %s137, %s139
      %p143 = scmp.eq.s32.totalorder %s19, 0
      %p144 = por %p142, %p143
      %p145 = scmp.ne.s32.totalorder %s137, %s139
      %p146 = scmp.eq.s32.totalorder %s24, 5
      %p147 = por %p145, %p146
      %p148 = scmp.ne.s32.totalorder %s139, %s140
      %p149 = scmp.eq.s32.totalorder %s24, 0
      %p150 = por %p148, %p149
      %p151 = scmp.ne.s32.totalorder %s139, %s140
      %p152 = scmp.eq.s32.totalorder %s25, 5
      %p153 = por %p151, %p152
      %p155 = scmp.ne.s32.totalorder %s140, %s154
      %p156 = scmp.eq.s32.totalorder %s25, 0
      %p157 = por %p155, %p156
      %s159 = sadd.s32 %s158, 1
      %p162 = scmp.eq.s32.totalorder %s19, 5
      %p163 = scmp.ne.s32.totalorder %s158, %s160
      %p164 = scmp.eq.s32.totalorder %s19, 0
      %p165 = por %p163, %p164
      %p166 = scmp.ne.s32.totalorder %s158, %s160
      %p167 = scmp.eq.s32.totalorder %s24, 5
      %p168 = por %p166, %p167
      %p169 = scmp.ne.s32.totalorder %s160, %s161
      %p170 = scmp.eq.s32.totalorder %s24, 0
      %p171 = por %p169, %p170
      %p172 = scmp.ne.s32.totalorder %s160, %s161
      %p173 = scmp.eq.s32.totalorder %s25, 5
      %p174 = por %p172, %p173
      %p176 = scmp.ne.s32.totalorder %s161, %s175
      %p177 = scmp.eq.s32.totalorder %s25, 0
      %p178 = por %p176, %p177
      %s179 = ssub.s32 %s26, %s38
      %s180 = ssub.s32 %s27, %s34
      %s181 = sor.u32 %s179, %s180
      %p182 = scmp.eq.s32.totalorder %s181, 0
      %s184 = sadd.s32 %s183, 1
      %s185 = scalar_select %p182, %s183, %s184
      %p188 = pneg %p182
      %p189 = scmp.eq.s32.totalorder %s19, 5
      %p190 = por %p188, %p189
      %p191 = scmp.ne.s32.totalorder %s183, %s186
      %p192 = scmp.eq.s32.totalorder %s19, 0
      %p193 = por %p191, %p192
      %p194 = scmp.ne.s32.totalorder %s183, %s186
      %p195 = scmp.eq.s32.totalorder %s24, 5
      %p196 = por %p194, %p195
      %p197 = scmp.ne.s32.totalorder %s186, %s187
      %p198 = scmp.eq.s32.totalorder %s24, 0
      %p199 = por %p197, %p198
      %p200 = scmp.ne.s32.totalorder %s186, %s187
      %p201 = scmp.eq.s32.totalorder %s25, 5
      %p202 = por %p200, %p201
      %p204 = scmp.ne.s32.totalorder %s187, %s203
      %p205 = scmp.eq.s32.totalorder %s25, 0
      %p206 = por %p204, %p205
      %p207 = scmp.le.s32.totalorder 1, %s19
      %p208 = scmp.lt.s32.totalorder %s19, 7
      %p209 = pnand %p207, %p208
      %p210 = pneg %p209
      // Predicated region
      $region9: #{tpu_custom_call.1} parent=5 // pred_check
        _
      $region10: #{tpu_custom_call.1} parent=5 // pred_check_branch
        %212 = sbr.rel (%p209) target = $region12
      $region11: #{tpu_custom_call.1} parent=5 // pred_region
        %s213 = ssub.s32 %s19, 1
        // Predicated region
        $region13: #{tpu_custom_call.1} parent=11 // pred_check
          %p214 = pneg %p108
        $region14: #{tpu_custom_call.1} parent=11 // pred_check_branch
          %216 = sbr.rel (%p214) target = $region16
        $region15: #{tpu_custom_call.1} parent=11 // pred_region
          %s218 = ssub.s32 128, 128
          %219 = vsyncadd [#allocation6], %s218
          %s221 = sshll.u32 [#allocation5], 4
          %s222 = int_to_ptr.vmem [resolvable:$true] %s221
          %224 = dma.hbm_to_vmem [thread:$0]  %s2, 128, %s222, [#allocation6]
        $region16: #{tpu_custom_call.1} parent=11 // pred_fallthru
          _
        // Predicated region
        $region17: #{tpu_custom_call.1} parent=11 // pred_check
          %p225 = pneg %p129
        $region18: #{tpu_custom_call.1} parent=11 // pred_check_branch
          %227 = sbr.rel (%p225) target = $region20
        $region19: #{tpu_custom_call.1} parent=11 // pred_region
          %s229 = ssub.s32 128, 128
          %230 = vsyncadd [#allocation6], %s229
          %s232 = sshll.u32 [#allocation7], 4
          %s233 = int_to_ptr.vmem [resolvable:$true] %s232
          %235 = dma.hbm_to_vmem [thread:$0]  %s3, 128, %s233, [#allocation6]
        $region20: #{tpu_custom_call.1} parent=11 // pred_fallthru
          _
        // Predicated region
        $region21: #{tpu_custom_call.1} parent=11 // pred_check
          %p236 = pneg %p150
        $region22: #{tpu_custom_call.1} parent=11 // pred_check_branch
          %238 = sbr.rel (%p236) target = $region24
        $region23: #{tpu_custom_call.1} parent=11 // pred_region
          _
        $region24: #{tpu_custom_call.1} parent=11 // pred_fallthru
          _
        // Predicated region
        $region25: #{tpu_custom_call.1} parent=11 // pred_check
          %p239 = pneg %p171
        $region26: #{tpu_custom_call.1} parent=11 // pred_check_branch
          %241 = sbr.rel (%p239) target = $region28
        $region27: #{tpu_custom_call.1} parent=11 // pred_region
          _
        $region28: #{tpu_custom_call.1} parent=11 // pred_fallthru
          _
      $region12: #{tpu_custom_call.1} parent=5 // pred_fallthru
        _
      %p242 = scmp.lt.s32.totalorder %s19, 6
      // Predicated region
      $region29: #{tpu_custom_call.1} parent=5 // pred_check
        %p243 = pneg %p242
      $region30: #{tpu_custom_call.1} parent=5 // pred_check_branch
        %245 = sbr.rel (%p243) target = $region32
      $region31: #{tpu_custom_call.1} parent=5 // pred_region
        // Predicated region
        $region33: #{tpu_custom_call.1} parent=31 // pred_check
          %p246 = pneg %p53
        $region34: #{tpu_custom_call.1} parent=31 // pred_check_branch
          %248 = sbr.rel (%p246) target = $region36
        $region35: #{tpu_custom_call.1} parent=31 // pred_region
          %p249 = scmp.lt.s32.totalorder %s26, 1
          %s250 = scalar_select %p249, %s26, 1
          %p251 = scmp.lt.s32.totalorder %s27, 2
          %s252 = scalar_select %p251, %s27, 2
          %s253 = smul.addr %s250, 3
          %s254 = sadd.s32 %s252, %s253
          %s255 = smul.addr %s254, 8
          %s256 = scalar_lea.vmem %s0, %s255
        $region36: #{tpu_custom_call.1} parent=31 // pred_fallthru
          _
        // Predicated region
        $region37: #{tpu_custom_call.1} parent=31 // pred_check
          %p257 = pneg %p81
        $region38: #{tpu_custom_call.1} parent=31 // pred_check_branch
          %259 = sbr.rel (%p257) target = $region40
        $region39: #{tpu_custom_call.1} parent=31 // pred_region
          %s260 = sand.u32 %s71, 1
          %s261 = scalar_lea.sflag [#allocation3], %s260
          %s262 = sand.u32 %s71, 1
          %s263 = smul.addr %s262, 24
          %s264 = scalar_lea.vmem [#allocation2], %s263
          %s266 = ssub.s32 384, 384
          %267 = vsyncadd %s261, %s266
          %s268 = smul.addr %s27, 3
          %s269 = smul.addr %s26, 9
          %s270 = sadd.s32 %s268, %s269
          %s271 = smul.addr %s270, 128
          %s272 = scalar_lea.hbm %s1, %s271
          %s273 = sshll.u32 %s264, 4
          %s274 = int_to_ptr.vmem [resolvable:$true] %s273
          %279 = dma.hbm_to_vmem [thread:$0]  %s272, 384, %s274, %s261, 128, 128, 8
        $region40: #{tpu_custom_call.1} parent=31 // pred_fallthru
          _
      $region32: #{tpu_custom_call.1} parent=5 // pred_fallthru
        _
      %p280 = scmp.le.s32.totalorder 1, %s19
      %p281 = scmp.lt.s32.totalorder %s19, 7
      %p282 = pnand %p280, %p281
      %p283 = pneg %p282
      // Predicated region
      $region41: #{tpu_custom_call.1} parent=5 // pred_check
        _
      $region42: #{tpu_custom_call.1} parent=5 // pred_check_branch
        %285 = sbr.rel (%p282) target = $region44
      $region43: #{tpu_custom_call.1} parent=5 // pred_region
        %s286 = ssub.s32 %s19, 1
        %s287 = sand.u32 %s74, 1
        %s288 = scalar_lea.sflag [#allocation3], %s287
        %s289 = sand.u32 %s74, 1
        %s290 = smul.addr %s289, 24
        %s291 = scalar_lea.vmem [#allocation2], %s290
        // Predicated region
        $region45: #{tpu_custom_call.1} parent=43 // pred_check
          %p292 = pneg %p87
        $region46: #{tpu_custom_call.1} parent=43 // pred_check_branch
          %294 = sbr.rel (%p292) target = $region48
        $region47: #{tpu_custom_call.1} parent=43 // pred_region
          %295 = dma.done %s288, 384
        $region48: #{tpu_custom_call.1} parent=43 // pred_fallthru
          _
        // Predicated region
        $region49: #{tpu_custom_call.1} parent=43 // pred_check
          %p296 = pneg %p108
        $region50: #{tpu_custom_call.1} parent=43 // pred_check_branch
          %298 = sbr.rel (%p296) target = $region52
        $region51: #{tpu_custom_call.1} parent=43 // pred_region
          %299 = dma.done [#allocation6], 128
        $region52: #{tpu_custom_call.1} parent=43 // pred_fallthru
          _
        // Predicated region
        $region53: #{tpu_custom_call.1} parent=43 // pred_check
          %p300 = pneg %p129
        $region54: #{tpu_custom_call.1} parent=43 // pred_check_branch
          %302 = sbr.rel (%p300) target = $region56
        $region55: #{tpu_custom_call.1} parent=43 // pred_region
          %303 = dma.done [#allocation6], 128
        $region56: #{tpu_custom_call.1} parent=43 // pred_fallthru
          _
        %p304 = scmp.lt.s32.totalorder %s28, 1
        %s305 = scalar_select %p304, %s28, 1
        %p306 = scmp.lt.s32.totalorder %s29, 2
        %s307 = scalar_select %p306, %s29, 2
        %s308 = smul.addr %s305, 3
        %s309 = sadd.s32 %s307, %s308
        %s310 = smul.addr %s309, 8
        %s311 = scalar_lea.vmem %s0, %s310
        %p312 = pneg %p59
        %p313 = pneg %p56
        %s314 = sand.u32 %s74, 1
        %s315 = scalar_lea.sflag [#allocation3], %s314
        %s316 = sand.u32 %s74, 1
        %s317 = smul.addr %s316, 24
        %s318 = scalar_lea.vmem [#allocation2], %s317
        %p319 = pneg %p87
        %p320 = pneg %p84
        %p321 = pneg %p108
        %p322 = pneg %p105
        %p323 = pneg %p129
        %p324 = pneg %p126
        %p325 = pneg %p150
        %p326 = pneg %p147
        %p327 = pneg %p171
        %p328 = pneg %p168
        %p329 = pneg %p199
        %p330 = pneg %p196
        %s331 = sand.u32 %s186, 1
        %s332 = scalar_lea.sflag [#allocation4], %s331
        %s333 = sand.u32 %s186, 1
        %s334 = smul.addr %s333, 16
        %s335 = scalar_lea.vmem [#allocation8], %s334
        %p336 = scmp.lt.s32.totalorder %s28, 1
        %s337 = scalar_select %p336, %s28, 1
        %p338 = scmp.lt.s32.totalorder %s29, 2
        %s339 = scalar_select %p338, %s29, 2
        %s340 = smul.addr %s337, 3
        %s341 = sadd.s32 %s339, %s340
        %s342 = smul.addr %s341, 8
        %s343 = scalar_lea.vmem %s0, %s342
        %v344 = vld [vmem:[%s343] sm:$0xff]
        %v345 = vld [vmem:[%s291] sm:$0xff]
        %s346 = scalar_lea.vmem %s291, 8 [#allocation2]
        %v347 = vld [vmem:[%s346] sm:$0xff]
        %s348 = scalar_lea.vmem %s291, 16 [#allocation2]
        %v349 = vld [vmem:[%s348] sm:$0xff]
        %v350 = vld [vmem:[#allocation5] sm:$0xff]
        %v351 = vld [vmem:[#allocation7] sm:$0xff]
        %vm352 = vcmask 64512
        %v354 = vsel %vm352, %v347, 0
        %356 = vmatprep.subr.mxu0 0.0
        %357 = vmatpush1.msra.mxu0 %v351
        %358 = vmatprep.subr.mxu0 0.0
        %359 = vmatpush1.msra.mxu0 0.0
        %360 = vmatprep.subr.mxu0 0.0
        %361 = vmatpush1.msra.mxu0 0.0
        %362 = vmatprep.subr.mxu0 0.0
        %363 = vmatpush1.msra.mxu0 0.0
        %364 = vmatprep.subr.mxu0 0.0
        %365 = vmatpush1.msra.mxu0 0.0
        %366 = vmatprep.subr.mxu0 0.0
        %367 = vmatpush1.msra.mxu0 0.0
        %368 = vmatprep.subr.mxu0 0.0
        %369 = vmatpush1.msra.mxu0 0.0
        %370 = vmatprep.subr.mxu0 0.0
        %371 = vmatpush1.msra.mxu0 0.0
        %372 = vmatprep.subr.mxu0 0.0
        %373 = vmatpush1.msra.mxu0 0.0
        %374 = vmatprep.subr.mxu0 0.0
        %375 = vmatpush1.msra.mxu0 0.0
        %376 = vmatprep.subr.mxu0 0.0
        %377 = vmatpush1.msra.mxu0 0.0
        %378 = vmatprep.subr.mxu0 0.0
        %379 = vmatpush1.msra.mxu0 0.0
        %380 = vmatprep.subr.mxu0 0.0
        %381 = vmatpush1.msra.mxu0 0.0
        %382 = vmatprep.subr.mxu0 0.0
        %383 = vmatpush1.msra.mxu0 0.0
        %384 = vmatprep.subr.mxu0 0.0
        %385 = vmatpush1.msra.mxu0 0.0
        %386 = vmatprep.subr.mxu0 0.0
        %387 = vmatpush1.msra.mxu0 0.0
        %388 = vmatprep.subr.mxu0 0.0
        %389 = vmatpush1.msra.mxu0 0.0
        %390 = vmatprep.subr.mxu0 0.0
        %391 = vmatpush1.msra.mxu0 0.0
        %392 = vmatprep.subr.mxu0 0.0
        %393 = vmatpush1.msra.mxu0 0.0
        %394 = vmatprep.subr.mxu0 0.0
        %395 = vmatpush1.msra.mxu0 0.0
        %396 = vmatprep.subr.mxu0 0.0
        %397 = vmatpush1.msra.mxu0 0.0
        %398 = vmatprep.subr.mxu0 0.0
        %399 = vmatpush1.msra.mxu0 0.0
        %400 = vmatprep.subr.mxu0 0.0
        %401 = vmatpush1.msra.mxu0 0.0
        %402 = vmatprep.subr.mxu0 0.0
        %403 = vmatpush1.msra.mxu0 0.0
        %404 = vmatprep.subr.mxu0 0.0
        %405 = vmatpush1.msra.mxu0 0.0
        %406 = vmatprep.subr.mxu0 0.0
        %407 = vmatpush1.msra.mxu0 0.0
        %408 = vmatprep.subr.mxu0 0.0
        %409 = vmatpush1.msra.mxu0 0.0
        %410 = vmatprep.subr.mxu0 0.0
        %411 = vmatpush1.msra.mxu0 0.0
        %412 = vmatprep.subr.mxu0 0.0
        %413 = vmatpush1.msra.mxu0 0.0
        %414 = vmatprep.subr.mxu0 0.0
        %415 = vmatpush1.msra.mxu0 0.0
        %416 = vmatprep.subr.mxu0 0.0
        %417 = vmatpush1.msra.mxu0 0.0
        %418 = vmatprep.subr.mxu0 0.0
        %419 = vmatpush1.msra.mxu0 0.0
        %420 = vmatprep.mubr.f32.mxu0 0.0
        %421 = vmatmul.mubr.f32.gmra.mrb[0].mxu0 %v354
        %v422 = vpop.f32.mrb[0].mxu0
        %v423 = vadd.f32 0.0, %v422
        %v424 = vpop.f32.mrb[0].mxu0
        %425 = vdwg.mxu0
        %v427 = vsel %vm352, %v344, 0
        %429 = vmatprep.subr.mxu0 0.0
        %430 = vmatpush1.msra.mxu0 %v350
        %431 = vmatprep.subr.mxu0 0.0
        %432 = vmatpush1.msra.mxu0 0.0
        %433 = vmatprep.subr.mxu0 0.0
        %434 = vmatpush1.msra.mxu0 0.0
        %435 = vmatprep.subr.mxu0 0.0
        %436 = vmatpush1.msra.mxu0 0.0
        %437 = vmatprep.subr.mxu0 0.0
        %438 = vmatpush1.msra.mxu0 0.0
        %439 = vmatprep.subr.mxu0 0.0
        %440 = vmatpush1.msra.mxu0 0.0
        %441 = vmatprep.subr.mxu0 0.0
        %442 = vmatpush1.msra.mxu0 0.0
        %443 = vmatprep.subr.mxu0 0.0
        %444 = vmatpush1.msra.mxu0 0.0
        %445 = vmatprep.subr.mxu0 0.0
        %446 = vmatpush1.msra.mxu0 0.0
        %447 = vmatprep.subr.mxu0 0.0
        %448 = vmatpush1.msra.mxu0 0.0
        %449 = vmatprep.subr.mxu0 0.0
        %450 = vmatpush1.msra.mxu0 0.0
        %451 = vmatprep.subr.mxu0 0.0
        %452 = vmatpush1.msra.mxu0 0.0
        %453 = vmatprep.subr.mxu0 0.0
        %454 = vmatpush1.msra.mxu0 0.0
        %455 = vmatprep.subr.mxu0 0.0
        %456 = vmatpush1.msra.mxu0 0.0
        %457 = vmatprep.subr.mxu0 0.0
        %458 = vmatpush1.msra.mxu0 0.0
        %459 = vmatprep.subr.mxu0 0.0
        %460 = vmatpush1.msra.mxu0 0.0
        %461 = vmatprep.subr.mxu0 0.0
        %462 = vmatpush1.msra.mxu0 0.0
        %463 = vmatprep.subr.mxu0 0.0
        %464 = vmatpush1.msra.mxu0 0.0
        %465 = vmatprep.subr.mxu0 0.0
        %466 = vmatpush1.msra.mxu0 0.0
        %467 = vmatprep.subr.mxu0 0.0
        %468 = vmatpush1.msra.mxu0 0.0
        %469 = vmatprep.subr.mxu0 0.0
        %470 = vmatpush1.msra.mxu0 0.0
        %471 = vmatprep.subr.mxu0 0.0
        %472 = vmatpush1.msra.mxu0 0.0
        %473 = vmatprep.subr.mxu0 0.0
        %474 = vmatpush1.msra.mxu0 0.0
        %475 = vmatprep.subr.mxu0 0.0
        %476 = vmatpush1.msra.mxu0 0.0
        %477 = vmatprep.subr.mxu0 0.0
        %478 = vmatpush1.msra.mxu0 0.0
        %479 = vmatprep.subr.mxu0 0.0
        %480 = vmatpush1.msra.mxu0 0.0
        %481 = vmatprep.subr.mxu0 0.0
        %482 = vmatpush1.msra.mxu0 0.0
        %483 = vmatprep.subr.mxu0 0.0
        %484 = vmatpush1.msra.mxu0 0.0
        %485 = vmatprep.subr.mxu0 0.0
        %486 = vmatpush1.msra.mxu0 0.0
        %487 = vmatprep.subr.mxu0 0.0
        %488 = vmatpush1.msra.mxu0 0.0
        %489 = vmatprep.subr.mxu0 0.0
        %490 = vmatpush1.msra.mxu0 0.0
        %491 = vmatprep.subr.mxu0 0.0
        %492 = vmatpush1.msra.mxu0 0.0
        %493 = vmatprep.mubr.f32.mxu0 0.0
        %494 = vmatmul.mubr.f32.gmra.mrb[0].mxu0 %v427
        %v495 = vpop.f32.mrb[0].mxu0
        %v496 = vadd.f32 %v423, %v495
        %v497 = vpop.f32.mrb[0].mxu0
        %498 = vdwg.mxu0
        %v500 = vsel %vm352, %v349, 0
        %502 = vmatprep.subr.mxu0 0.0
        %503 = vmatpush1.msra.mxu0 %v351
        %504 = vmatprep.subr.mxu0 0.0
        %505 = vmatpush1.msra.mxu0 0.0
        %506 = vmatprep.subr.mxu0 0.0
        %507 = vmatpush1.msra.mxu0 0.0
        %508 = vmatprep.subr.mxu0 0.0
        %509 = vmatpush1.msra.mxu0 0.0
        %510 = vmatprep.subr.mxu0 0.0
        %511 = vmatpush1.msra.mxu0 0.0
        %512 = vmatprep.subr.mxu0 0.0
        %513 = vmatpush1.msra.mxu0 0.0
        %514 = vmatprep.subr.mxu0 0.0
        %515 = vmatpush1.msra.mxu0 0.0
        %516 = vmatprep.subr.mxu0 0.0
        %517 = vmatpush1.msra.mxu0 0.0
        %518 = vmatprep.subr.mxu0 0.0
        %519 = vmatpush1.msra.mxu0 0.0
        %520 = vmatprep.subr.mxu0 0.0
        %521 = vmatpush1.msra.mxu0 0.0
        %522 = vmatprep.subr.mxu0 0.0
        %523 = vmatpush1.msra.mxu0 0.0
        %524 = vmatprep.subr.mxu0 0.0
        %525 = vmatpush1.msra.mxu0 0.0
        %526 = vmatprep.subr.mxu0 0.0
        %527 = vmatpush1.msra.mxu0 0.0
        %528 = vmatprep.subr.mxu0 0.0
        %529 = vmatpush1.msra.mxu0 0.0
        %530 = vmatprep.subr.mxu0 0.0
        %531 = vmatpush1.msra.mxu0 0.0
        %532 = vmatprep.subr.mxu0 0.0
        %533 = vmatpush1.msra.mxu0 0.0
        %534 = vmatprep.subr.mxu0 0.0
        %535 = vmatpush1.msra.mxu0 0.0
        %536 = vmatprep.subr.mxu0 0.0
        %537 = vmatpush1.msra.mxu0 0.0
        %538 = vmatprep.subr.mxu0 0.0
        %539 = vmatpush1.msra.mxu0 0.0
        %540 = vmatprep.subr.mxu0 0.0
        %541 = vmatpush1.msra.mxu0 0.0
        %542 = vmatprep.subr.mxu0 0.0
        %543 = vmatpush1.msra.mxu0 0.0
        %544 = vmatprep.subr.mxu0 0.0
        %545 = vmatpush1.msra.mxu0 0.0
        %546 = vmatprep.subr.mxu0 0.0
        %547 = vmatpush1.msra.mxu0 0.0
        %548 = vmatprep.subr.mxu0 0.0
        %549 = vmatpush1.msra.mxu0 0.0
        %550 = vmatprep.subr.mxu0 0.0
        %551 = vmatpush1.msra.mxu0 0.0
        %552 = vmatprep.subr.mxu0 0.0
        %553 = vmatpush1.msra.mxu0 0.0
        %554 = vmatprep.subr.mxu0 0.0
        %555 = vmatpush1.msra.mxu0 0.0
        %556 = vmatprep.subr.mxu0 0.0
        %557 = vmatpush1.msra.mxu0 0.0
        %558 = vmatprep.subr.mxu0 0.0
        %559 = vmatpush1.msra.mxu0 0.0
        %560 = vmatprep.subr.mxu0 0.0
        %561 = vmatpush1.msra.mxu0 0.0
        %562 = vmatprep.subr.mxu0 0.0
        %563 = vmatpush1.msra.mxu0 0.0
        %564 = vmatprep.subr.mxu0 0.0
        %565 = vmatpush1.msra.mxu0 0.0
        %566 = vmatprep.mubr.f32.mxu0 0.0
        %567 = vmatmul.mubr.f32.gmra.mrb[0].mxu0 %v500
        %v568 = vpop.f32.mrb[0].mxu0
        %v569 = vadd.f32 0.0, %v568
        %v570 = vpop.f32.mrb[0].mxu0
        %571 = vdwg.mxu0
        %v573 = vsel %vm352, %v345, 0
        %575 = vmatprep.subr.mxu0 0.0
        %576 = vmatpush1.msra.mxu0 %v350
        %577 = vmatprep.subr.mxu0 0.0
        %578 = vmatpush1.msra.mxu0 0.0
        %579 = vmatprep.subr.mxu0 0.0
        %580 = vmatpush1.msra.mxu0 0.0
        %581 = vmatprep.subr.mxu0 0.0
        %582 = vmatpush1.msra.mxu0 0.0
        %583 = vmatprep.subr.mxu0 0.0
        %584 = vmatpush1.msra.mxu0 0.0
        %585 = vmatprep.subr.mxu0 0.0
        %586 = vmatpush1.msra.mxu0 0.0
        %587 = vmatprep.subr.mxu0 0.0
        %588 = vmatpush1.msra.mxu0 0.0
        %589 = vmatprep.subr.mxu0 0.0
        %590 = vmatpush1.msra.mxu0 0.0
        %591 = vmatprep.subr.mxu0 0.0
        %592 = vmatpush1.msra.mxu0 0.0
        %593 = vmatprep.subr.mxu0 0.0
        %594 = vmatpush1.msra.mxu0 0.0
        %595 = vmatprep.subr.mxu0 0.0
        %596 = vmatpush1.msra.mxu0 0.0
        %597 = vmatprep.subr.mxu0 0.0
        %598 = vmatpush1.msra.mxu0 0.0
        %599 = vmatprep.subr.mxu0 0.0
        %600 = vmatpush1.msra.mxu0 0.0
        %601 = vmatprep.subr.mxu0 0.0
        %602 = vmatpush1.msra.mxu0 0.0
        %603 = vmatprep.subr.mxu0 0.0
        %604 = vmatpush1.msra.mxu0 0.0
        %605 = vmatprep.subr.mxu0 0.0
        %606 = vmatpush1.msra.mxu0 0.0
        %607 = vmatprep.subr.mxu0 0.0
        %608 = vmatpush1.msra.mxu0 0.0
        %609 = vmatprep.subr.mxu0 0.0
        %610 = vmatpush1.msra.mxu0 0.0
        %611 = vmatprep.subr.mxu0 0.0
        %612 = vmatpush1.msra.mxu0 0.0
        %613 = vmatprep.subr.mxu0 0.0
        %614 = vmatpush1.msra.mxu0 0.0
        %615 = vmatprep.subr.mxu0 0.0
        %616 = vmatpush1.msra.mxu0 0.0
        %617 = vmatprep.subr.mxu0 0.0
        %618 = vmatpush1.msra.mxu0 0.0
        %619 = vmatprep.subr.mxu0 0.0
        %620 = vmatpush1.msra.mxu0 0.0
        %621 = vmatprep.subr.mxu0 0.0
        %622 = vmatpush1.msra.mxu0 0.0
        %623 = vmatprep.subr.mxu0 0.0
        %624 = vmatpush1.msra.mxu0 0.0
        %625 = vmatprep.subr.mxu0 0.0
        %626 = vmatpush1.msra.mxu0 0.0
        %627 = vmatprep.subr.mxu0 0.0
        %628 = vmatpush1.msra.mxu0 0.0
        %629 = vmatprep.subr.mxu0 0.0
        %630 = vmatpush1.msra.mxu0 0.0
        %631 = vmatprep.subr.mxu0 0.0
        %632 = vmatpush1.msra.mxu0 0.0
        %633 = vmatprep.subr.mxu0 0.0
        %634 = vmatpush1.msra.mxu0 0.0
        %635 = vmatprep.subr.mxu0 0.0
        %636 = vmatpush1.msra.mxu0 0.0
        %637 = vmatprep.subr.mxu0 0.0
        %638 = vmatpush1.msra.mxu0 0.0
        %639 = vmatprep.mubr.f32.mxu0 0.0
        %640 = vmatmul.mubr.f32.gmra.mrb[0].mxu0 %v573
        %v641 = vpop.f32.mrb[0].mxu0
        %v642 = vadd.f32 %v569, %v641
        %v643 = vpop.f32.mrb[0].mxu0
        %644 = vdwg.mxu0
        %v645 = vld [vmem:[%s4] sm:$0xff]
        %v646 = vld [vmem:[%s4 + $0x8] sm:$0xff]
        %v647 = vld [vmem:[%s5] sm:$0xff]
        %v648 = vld [vmem:[%s5 + $0x8] sm:$0xff]
        %v650 = vsel %vm352, %v647, 0
        %v653 = vsel %vm352, %v648, 0
        %655 = vmatprep.subr.mxu0 0.0
        %656 = vmatpush1.msra.mxu0 %v642
        %657 = vmatprep.subr.mxu0 0.0
        %658 = vmatpush1.msra.mxu0 0.0
        %659 = vmatprep.subr.mxu0 0.0
        %660 = vmatpush1.msra.mxu0 0.0
        %661 = vmatprep.subr.mxu0 0.0
        %662 = vmatpush1.msra.mxu0 0.0
        %663 = vmatprep.subr.mxu0 0.0
        %664 = vmatpush1.msra.mxu0 0.0
        %665 = vmatprep.subr.mxu0 0.0
        %666 = vmatpush1.msra.mxu0 0.0
        %667 = vmatprep.subr.mxu0 0.0
        %668 = vmatpush1.msra.mxu0 0.0
        %669 = vmatprep.subr.mxu0 0.0
        %670 = vmatpush1.msra.mxu0 0.0
        %671 = vmatprep.subr.mxu0 0.0
        %672 = vmatpush1.msra.mxu0 0.0
        %673 = vmatprep.subr.mxu0 0.0
        %674 = vmatpush1.msra.mxu0 0.0
        %675 = vmatprep.subr.mxu0 0.0
        %676 = vmatpush1.msra.mxu0 0.0
        %677 = vmatprep.subr.mxu0 0.0
        %678 = vmatpush1.msra.mxu0 0.0
        %679 = vmatprep.subr.mxu0 0.0
        %680 = vmatpush1.msra.mxu0 0.0
        %681 = vmatprep.subr.mxu0 0.0
        %682 = vmatpush1.msra.mxu0 0.0
        %683 = vmatprep.subr.mxu0 0.0
        %684 = vmatpush1.msra.mxu0 0.0
        %685 = vmatprep.subr.mxu0 0.0
        %686 = vmatpush1.msra.mxu0 0.0
        %687 = vmatprep.subr.mxu0 0.0
        %688 = vmatpush1.msra.mxu0 0.0
        %689 = vmatprep.subr.mxu0 0.0
        %690 = vmatpush1.msra.mxu0 0.0
        %691 = vmatprep.subr.mxu0 0.0
        %692 = vmatpush1.msra.mxu0 0.0
        %693 = vmatprep.subr.mxu0 0.0
        %694 = vmatpush1.msra.mxu0 0.0
        %695 = vmatprep.subr.mxu0 0.0
        %696 = vmatpush1.msra.mxu0 0.0
        %697 = vmatprep.subr.mxu0 0.0
        %698 = vmatpush1.msra.mxu0 0.0
        %699 = vmatprep.subr.mxu0 0.0
        %700 = vmatpush1.msra.mxu0 0.0
        %701 = vmatprep.subr.mxu0 0.0
        %702 = vmatpush1.msra.mxu0 0.0
        %703 = vmatprep.subr.mxu0 0.0
        %704 = vmatpush1.msra.mxu0 0.0
        %705 = vmatprep.subr.mxu0 0.0
        %706 = vmatpush1.msra.mxu0 0.0
        %707 = vmatprep.subr.mxu0 0.0
        %708 = vmatpush1.msra.mxu0 0.0
        %709 = vmatprep.subr.mxu0 0.0
        %710 = vmatpush1.msra.mxu0 0.0
        %711 = vmatprep.subr.mxu0 0.0
        %712 = vmatpush1.msra.mxu0 0.0
        %713 = vmatprep.subr.mxu0 0.0
        %714 = vmatpush1.msra.mxu0 0.0
        %715 = vmatprep.subr.mxu0 0.0
        %716 = vmatpush1.msra.mxu0 0.0
        %717 = vmatprep.subr.mxu0 0.0
        %718 = vmatpush1.msra.mxu0 0.0
        %719 = vmatprep.mubr.f32.mxu0 0.0
        %720 = vmatmul.mubr.f32.gmra.mrb[0].mxu0 %v650
        %v721 = vpop.f32.mrb[0].mxu0
        %v722 = vadd.f32 0.0, %v721
        %v723 = vpop.f32.mrb[0].mxu0
        %724 = vmatprep.mubr.f32.mxu0 0.0
        %725 = vmatmul.mubr.f32.gmra.mrb[0].mxu0 %v653
        %v726 = vpop.f32.mrb[0].mxu0
        %v727 = vadd.f32 0.0, %v726
        %v728 = vpop.f32.mrb[0].mxu0
        %729 = vdwg.mxu0
        %v731 = vsel %vm352, %v645, 0
        %v734 = vsel %vm352, %v646, 0
        %736 = vmatprep.subr.mxu0 0.0
        %737 = vmatpush1.msra.mxu0 %v496
        %738 = vmatprep.subr.mxu0 0.0
        %739 = vmatpush1.msra.mxu0 0.0
        %740 = vmatprep.subr.mxu0 0.0
        %741 = vmatpush1.msra.mxu0 0.0
        %742 = vmatprep.subr.mxu0 0.0
        %743 = vmatpush1.msra.mxu0 0.0
        %744 = vmatprep.subr.mxu0 0.0
        %745 = vmatpush1.msra.mxu0 0.0
        %746 = vmatprep.subr.mxu0 0.0
        %747 = vmatpush1.msra.mxu0 0.0
        %748 = vmatprep.subr.mxu0 0.0
        %749 = vmatpush1.msra.mxu0 0.0
        %750 = vmatprep.subr.mxu0 0.0
        %751 = vmatpush1.msra.mxu0 0.0
        %752 = vmatprep.subr.mxu0 0.0
        %753 = vmatpush1.msra.mxu0 0.0
        %754 = vmatprep.subr.mxu0 0.0
        %755 = vmatpush1.msra.mxu0 0.0
        %756 = vmatprep.subr.mxu0 0.0
        %757 = vmatpush1.msra.mxu0 0.0
        %758 = vmatprep.subr.mxu0 0.0
        %759 = vmatpush1.msra.mxu0 0.0
        %760 = vmatprep.subr.mxu0 0.0
        %761 = vmatpush1.msra.mxu0 0.0
        %762 = vmatprep.subr.mxu0 0.0
        %763 = vmatpush1.msra.mxu0 0.0
        %764 = vmatprep.subr.mxu0 0.0
        %765 = vmatpush1.msra.mxu0 0.0
        %766 = vmatprep.subr.mxu0 0.0
        %767 = vmatpush1.msra.mxu0 0.0
        %768 = vmatprep.subr.mxu0 0.0
        %769 = vmatpush1.msra.mxu0 0.0
        %770 = vmatprep.subr.mxu0 0.0
        %771 = vmatpush1.msra.mxu0 0.0
        %772 = vmatprep.subr.mxu0 0.0
        %773 = vmatpush1.msra.mxu0 0.0
        %774 = vmatprep.subr.mxu0 0.0
        %775 = vmatpush1.msra.mxu0 0.0
        %776 = vmatprep.subr.mxu0 0.0
        %777 = vmatpush1.msra.mxu0 0.0
        %778 = vmatprep.subr.mxu0 0.0
        %779 = vmatpush1.msra.mxu0 0.0
        %780 = vmatprep.subr.mxu0 0.0
        %781 = vmatpush1.msra.mxu0 0.0
        %782 = vmatprep.subr.mxu0 0.0
        %783 = vmatpush1.msra.mxu0 0.0
        %784 = vmatprep.subr.mxu0 0.0
        %785 = vmatpush1.msra.mxu0 0.0
        %786 = vmatprep.subr.mxu0 0.0
        %787 = vmatpush1.msra.mxu0 0.0
        %788 = vmatprep.subr.mxu0 0.0
        %789 = vmatpush1.msra.mxu0 0.0
        %790 = vmatprep.subr.mxu0 0.0
        %791 = vmatpush1.msra.mxu0 0.0
        %792 = vmatprep.subr.mxu0 0.0
        %793 = vmatpush1.msra.mxu0 0.0
        %794 = vmatprep.subr.mxu0 0.0
        %795 = vmatpush1.msra.mxu0 0.0
        %796 = vmatprep.subr.mxu0 0.0
        %797 = vmatpush1.msra.mxu0 0.0
        %798 = vmatprep.subr.mxu0 0.0
        %799 = vmatpush1.msra.mxu0 0.0
        %800 = vmatprep.mubr.f32.mxu0 0.0
        %801 = vmatmul.mubr.f32.gmra.mrb[0].mxu0 %v731
        %v802 = vpop.f32.mrb[0].mxu0
        %v803 = vadd.f32 %v722, %v802
        %v804 = vpop.f32.mrb[0].mxu0
        %805 = vmatprep.mubr.f32.mxu0 0.0
        %806 = vmatmul.mubr.f32.gmra.mrb[0].mxu0 %v734
        %v807 = vpop.f32.mrb[0].mxu0
        %v808 = vadd.f32 %v727, %v807
        %v809 = vpop.f32.mrb[0].mxu0
        %810 = vdwg.mxu0
        %vm811 = vcmask 130048
        %812 = vst.msk [vmem:[%s335] sm:$0xff] %vm811, %v803
        %813 = vst.msk [vmem:[%s335 + $0x8] sm:$0xff] %vm811, %v808
        %s814 = sand.u32 %s186, 1
        %s815 = scalar_lea.sflag [#allocation4], %s814
        %s816 = sand.u32 %s186, 1
        %s817 = smul.addr %s816, 16
        %s818 = scalar_lea.vmem [#allocation8], %s817
        // Predicated region
        $region57: #{tpu_custom_call.1} parent=43 // pred_check
          %p819 = pneg %p196
        $region58: #{tpu_custom_call.1} parent=43 // pred_check_branch
          %821 = sbr.rel (%p819) target = $region60
        $region59: #{tpu_custom_call.1} parent=43 // pred_region
          %s823 = ssub.s32 256, 256
          %824 = vsyncadd %s815, %s823
          %s825 = smul.addr %s29, 2
          %s826 = smul.addr %s28, 6
          %s827 = sadd.s32 %s825, %s826
          %s828 = smul.addr %s827, 128
          %s829 = scalar_lea.hbm %s6, %s828
          %s830 = sshll.u32 %s818, 4
          %s831 = int_to_ptr.vmem [resolvable:$true] %s830
          %836 = dma.vmem_to_hbm [thread:$0]  %s831, 256, %s829, %s815, 128, 128, 8
        $region60: #{tpu_custom_call.1} parent=43 // pred_fallthru
          _
      $region44: #{tpu_custom_call.1} parent=5 // pred_fallthru
        _
      %p837 = scmp.le.s32.totalorder 2, %s19
      // Predicated region
      $region61: #{tpu_custom_call.1} parent=5 // pred_check
        %p838 = pneg %p837
      $region62: #{tpu_custom_call.1} parent=5 // pred_check_branch
        %840 = sbr.rel (%p838) target = $region64
      $region63: #{tpu_custom_call.1} parent=5 // pred_region
        %s841 = ssub.s32 %s19, 2
        // Predicated region
        $region65: #{tpu_custom_call.1} parent=63 // pred_check
          %p842 = pneg %p202
        $region66: #{tpu_custom_call.1} parent=63 // pred_check_branch
          %844 = sbr.rel (%p842) target = $region68
        $region67: #{tpu_custom_call.1} parent=63 // pred_region
          %s845 = sand.u32 %s187, 1
          %s846 = scalar_lea.sflag [#allocation4], %s845
          %s847 = sand.u32 %s187, 1
          %s848 = smul.addr %s847, 16
          %s849 = scalar_lea.vmem [#allocation8], %s848
          %850 = dma.done %s846, 256
        $region68: #{tpu_custom_call.1} parent=63 // pred_fallthru
          _
      $region64: #{tpu_custom_call.1} parent=5 // pred_fallthru
        _
    $region6: #{tpu_custom_call.1} parent=1 // loop_footer
      %s23 = sadd.s32 1, %s19
    $region7: #{tpu_custom_call.1} parent=1 // loop_footer_branch
      %18 = sbr.rel target = $region3
    $region8: #{tpu_custom_call.1} parent=1 // loop_exit
      _
    %851 = vsyncpa [#allocation3], 1
    %s852 = scalar_lea.sflag [#allocation3], 1
    %853 = vsyncpa %s852, 1
    %854 = vsyncpa [#allocation6], 1
    %855 = vsyncpa [#allocation4], 1
    %s856 = scalar_lea.sflag [#allocation4], 1
    %857 = vsyncpa %s856, 1

</llo_original>
